<compile_context>
chip_gen: v5e
topology: v5e:2x2
jax: 0.10.0
libtpu: 0.0.40
codegen_flags: <defaults>
</compile_context>

<pallas_src>
import functools

import jax
import jax.numpy as jnp
from jax.experimental import pallas as pl
from jax.experimental.pallas import tpu as pltpu

IN_F = 10     # layer1 in_features
HID_F = 50    # layer1/layer2 out_features
OUT_F = 1     # output_layer out_features
F = 128       # lane-padded feature width used inside the kernel


def _round_up(n, m):
    return ((n + m - 1) // m) * m


def mlp_kernel(x_ref, w1_ref, b1_ref, w2_ref, b2_ref, w3_ref, b3_ref, *out_refs):
    # layer1: Linear(10, 50) + ReLU   (padded lanes stay 0: relu(0 + 0) = 0)
    x = x_ref[...]
    h1 = jnp.dot(x, w1_ref[...], preferred_element_type=jnp.float32) + b1_ref[...]
    h1 = jnp.maximum(h1, 0.0)
    # layer2: Linear(50, 50) + ReLU
    h2 = jnp.dot(h1.astype(w2_ref.dtype), w2_ref[...],
                 preferred_element_type=jnp.float32) + b2_ref[...]
    h2 = jnp.maximum(h2, 0.0)
    # output_layer: Linear(50, 1)  — written into a 128-wide lane-dense slab
    out = jnp.dot(h2.astype(w3_ref.dtype), w3_ref[...],
                  preferred_element_type=jnp.float32) + b3_ref[...]
    out_refs[0][...] = out.astype(out_refs[0].dtype)
    if len(out_refs) > 1:
        # post-layer2 activations, only needed for the "chain of thought"
        out_refs[1][...] = h2.astype(out_refs[1].dtype)


def _pad2(a, rows, cols, dtype):
    r, c = a.shape
    return jnp.pad(a.astype(dtype), ((0, rows - r), (0, cols - c)))


def cot_model_forward(x, params, *, block_b=512, return_hidden=True,
                      compute_dtype=jnp.float32):
    """Forward pass of CoTModel. Returns (output[B,1], cot_steps list)."""
    w1, b1, w2, b2, w3, b3 = params
    B = x.shape[0]

    # --- lane-dense padding (feature dims -> 128, batch -> multiple of TB) ---
    tb = max(8, min(block_b, _round_up(B, 8)))
    b_pad = _round_up(B, tb)
    grid = (b_pad // tb,)

    xp = jnp.pad(x.astype(compute_dtype), ((0, b_pad - B), (0, F - IN_F)))
    w1p = _pad2(w1, F, F, compute_dtype)
    w2p = _pad2(w2, F, F, compute_dtype)
    w3p = _pad2(w3, F, F, compute_dtype)
    b1p = _pad2(b1, 1, F, jnp.float32)
    b2p = _pad2(b2, 1, F, jnp.float32)
    b3p = _pad2(b3, 1, F, jnp.float32)

    # x/out/hidden stream over the batch grid; weights & biases use a constant
    # index_map so they are loaded once and stay resident in VMEM.
    act_spec = pl.BlockSpec((tb, F), lambda i: (i, 0))
    w_spec = pl.BlockSpec((F, F), lambda i: (0, 0))
    b_spec = pl.BlockSpec((1, F), lambda i: (0, 0))

    if return_hidden:
        out_shape = (jax.ShapeDtypeStruct((b_pad, F), jnp.float32),
                     jax.ShapeDtypeStruct((b_pad, F), jnp.float32))
        out_specs = (act_spec, act_spec)
    else:
        out_shape = jax.ShapeDtypeStruct((b_pad, F), jnp.float32)
        out_specs = act_spec

    dtype_bytes = jnp.dtype(compute_dtype).itemsize
    n_out = 2 if return_hidden else 1
    cost = pl.CostEstimate(
        flops=2 * B * (IN_F * HID_F + HID_F * HID_F + HID_F * OUT_F),
        transcendentals=0,
        bytes_accessed=b_pad * F * (dtype_bytes + 4 * n_out) + 3 * F * F * dtype_bytes,
    )

    result = pl.pallas_call(
        mlp_kernel,
        out_shape=out_shape,
        grid=grid,
        in_specs=[act_spec, w_spec, b_spec, w_spec, b_spec, w_spec, b_spec],
        out_specs=out_specs,
        compiler_params=pltpu.CompilerParams(
            dimension_semantics=("parallel",),   # megacore-shard the batch axis
            vmem_limit_bytes=64 << 20,
        ),
        cost_estimate=cost,
    )(xp, w1p, b1p, w2p, b2p, w3p, b3p)

    if return_hidden:
        out_pad, hid_pad = result
    else:
        out_pad, hid_pad = result, None

    out = out_pad[:B, :OUT_F]                    # slice back from the 128-wide slab

    if not return_hidden:
        return out, []

    hidden = hid_pad[:B, :HID_F]
    # generate_cot: host-side string formatting of the post-layer2 activations,
    # matching PyTorch's forward (which passes the hidden x into generate_cot).
    # NOTE: formatting a device array forces a device->host transfer.
    cot_steps = [f"Step {step + 1}: reasoning with input {hidden}"
                 for step in range(3)]
    return out, cot_steps


def init_params(key):
    k1, k2, k3, k4, k5, k6 = jax.random.split(key, 6)
    # deterministic init (shapes match nn.Linear(10,50), (50,50), (50,1),
    # stored transposed as [in, out])
    w1 = jax.random.normal(k1, (IN_F, HID_F), jnp.float32) * 0.1
    b1 = jax.random.normal(k2, (1, HID_F), jnp.float32) * 0.01
    w2 = jax.random.normal(k3, (HID_F, HID_F), jnp.float32) * 0.1
    b2 = jax.random.normal(k4, (1, HID_F), jnp.float32) * 0.01
    w3 = jax.random.normal(k5, (HID_F, OUT_F), jnp.float32) * 0.1
    b3 = jax.random.normal(k6, (1, OUT_F), jnp.float32) * 0.01
    return (w1, b1, w2, b2, w3, b3)


if __name__ == "__main__":
    key = jax.random.PRNGKey(0)
    pkey, xkey = jax.random.split(key)
    params = init_params(pkey)

    B = 2
    x = jax.random.normal(xkey, (B, IN_F), jnp.float32)

    # f32 compute here so the tolerance check is tight; on v6e/v7x pass
    # compute_dtype=jnp.bfloat16 for ~2x less HBM traffic (f32 accumulation).
    out, cot = cot_model_forward(x, params, compute_dtype=jnp.float32)
    out = jax.block_until_ready(out)

    # sanity check against a plain-JAX reference
    w1, b1, w2, b2, w3, b3 = params
    h1 = jnp.maximum(x @ w1 + b1, 0.0)
    h2 = jnp.maximum(h1 @ w2 + b2, 0.0)
    ref = h2 @ w3 + b3
    assert out.shape == (B, OUT_F)
    assert len(cot) == 3
    assert jnp.allclose(out, ref, atol=1e-5), "mismatch vs reference"

    # also exercise the output-only path (no hidden writeback -> >80% less HBM)
    out2, _ = cot_model_forward(x, params, return_hidden=False)
    out2 = jax.block_until_ready(out2)
    assert jnp.allclose(out2, ref, atol=1e-5), "mismatch vs reference (no hidden)"

    print("KERNEL_OK")
</pallas_src>

<mosaic_0001>
module attributes {stable_mosaic.version = 11 : i64} {
  func.func @mlp_kernel(%arg0: i32, %arg1: memref<8x128xf32, #tpu.memory_space<vmem>>, %arg2: memref<128x128xf32, #tpu.memory_space<vmem>>, %arg3: memref<1x128xf32, #tpu.memory_space<vmem>>, %arg4: memref<128x128xf32, #tpu.memory_space<vmem>>, %arg5: memref<1x128xf32, #tpu.memory_space<vmem>>, %arg6: memref<128x128xf32, #tpu.memory_space<vmem>>, %arg7: memref<1x128xf32, #tpu.memory_space<vmem>>, %arg8: memref<8x128xf32, #tpu.memory_space<vmem>>, %arg9: memref<8x128xf32, #tpu.memory_space<vmem>>) attributes {dimension_semantics = [#tpu.dimension_semantics<parallel>], iteration_bounds = array<i64: 1>, scalar_prefetch = 0 : i64, scratch_operands = 0 : i64, tpu.core_type = #tpu.core_type<tc>, window_params = [{transform_indices = @transform_0, window_bounds = array<i64: 8, 128>}, {pipeline_mode = #tpu.pipeline_mode<synchronous>, transform_indices = @transform_1, window_bounds = array<i64: 128, 128>}, {pipeline_mode = #tpu.pipeline_mode<synchronous>, transform_indices = @transform_2, window_bounds = array<i64: 1, 128>}, {pipeline_mode = #tpu.pipeline_mode<synchronous>, transform_indices = @transform_3, window_bounds = array<i64: 128, 128>}, {pipeline_mode = #tpu.pipeline_mode<synchronous>, transform_indices = @transform_4, window_bounds = array<i64: 1, 128>}, {pipeline_mode = #tpu.pipeline_mode<synchronous>, transform_indices = @transform_5, window_bounds = array<i64: 128, 128>}, {pipeline_mode = #tpu.pipeline_mode<synchronous>, transform_indices = @transform_6, window_bounds = array<i64: 1, 128>}, {transform_indices = @transform_7, window_bounds = array<i64: 8, 128>}, {transform_indices = @transform_8, window_bounds = array<i64: 8, 128>}]} {
    %c0 = arith.constant 0 : index
    %c0_0 = arith.constant 0 : index
    %0 = vector.load %arg1[%c0, %c0_0] : memref<8x128xf32, #tpu.memory_space<vmem>>, vector<8x128xf32>
    %c0_1 = arith.constant 0 : index
    %c0_2 = arith.constant 0 : index
    %1 = vector.load %arg2[%c0_1, %c0_2] : memref<128x128xf32, #tpu.memory_space<vmem>>, vector<128x128xf32>
    %cst = arith.constant dense<0.000000e+00> : vector<8x128xf32>
    %2 = tpu.matmul %0, %1, %cst {dimension_numbers = #tpu.dot_dimension_numbers<[1], [0], [0], [1], [0, 0, 1, 1], [], []>} : vector<8x128xf32>, vector<128x128xf32>, vector<8x128xf32> -> vector<8x128xf32>
    %c0_3 = arith.constant 0 : index
    %c0_4 = arith.constant 0 : index
    %3 = vector.load %arg3[%c0_3, %c0_4] : memref<1x128xf32, #tpu.memory_space<vmem>>, vector<1x128xf32>
    %4 = vector.broadcast %3 : vector<1x128xf32> to vector<8x128xf32>
    %5 = arith.addf %2, %4 : vector<8x128xf32>
    %cst_5 = arith.constant 0.000000e+00 : f32
    %6 = vector.broadcast %cst_5 : f32 to vector<8x128xf32>
    %7 = arith.maximumf %5, %6 : vector<8x128xf32>
    %c0_6 = arith.constant 0 : index
    %c0_7 = arith.constant 0 : index
    %8 = vector.load %arg4[%c0_6, %c0_7] : memref<128x128xf32, #tpu.memory_space<vmem>>, vector<128x128xf32>
    %cst_8 = arith.constant dense<0.000000e+00> : vector<8x128xf32>
    %9 = tpu.matmul %7, %8, %cst_8 {dimension_numbers = #tpu.dot_dimension_numbers<[1], [0], [0], [1], [0, 0, 1, 1], [], []>} : vector<8x128xf32>, vector<128x128xf32>, vector<8x128xf32> -> vector<8x128xf32>
    %c0_9 = arith.constant 0 : index
    %c0_10 = arith.constant 0 : index
    %10 = vector.load %arg5[%c0_9, %c0_10] : memref<1x128xf32, #tpu.memory_space<vmem>>, vector<1x128xf32>
    %11 = vector.broadcast %10 : vector<1x128xf32> to vector<8x128xf32>
    %12 = arith.addf %9, %11 : vector<8x128xf32>
    %cst_11 = arith.constant 0.000000e+00 : f32
    %13 = vector.broadcast %cst_11 : f32 to vector<8x128xf32>
    %14 = arith.maximumf %12, %13 : vector<8x128xf32>
    %c0_12 = arith.constant 0 : index
    %c0_13 = arith.constant 0 : index
    %15 = vector.load %arg6[%c0_12, %c0_13] : memref<128x128xf32, #tpu.memory_space<vmem>>, vector<128x128xf32>
    %cst_14 = arith.constant dense<0.000000e+00> : vector<8x128xf32>
    %16 = tpu.matmul %14, %15, %cst_14 {dimension_numbers = #tpu.dot_dimension_numbers<[1], [0], [0], [1], [0, 0, 1, 1], [], []>} : vector<8x128xf32>, vector<128x128xf32>, vector<8x128xf32> -> vector<8x128xf32>
    %c0_15 = arith.constant 0 : index
    %c0_16 = arith.constant 0 : index
    %17 = vector.load %arg7[%c0_15, %c0_16] : memref<1x128xf32, #tpu.memory_space<vmem>>, vector<1x128xf32>
    %18 = vector.broadcast %17 : vector<1x128xf32> to vector<8x128xf32>
    %19 = arith.addf %16, %18 : vector<8x128xf32>
    %c0_17 = arith.constant 0 : index
    %c0_18 = arith.constant 0 : index
    %20 = vector.load %arg8[%c0_17, %c0_18] : memref<8x128xf32, #tpu.memory_space<vmem>>, vector<8x128xf32>
    tpu.vector_store %arg8[%c0_17, %c0_18], %19 {strides = array<i32>} : memref<8x128xf32, #tpu.memory_space<vmem>>, vector<8x128xf32>,
    %c0_19 = arith.constant 0 : index
    %c0_20 = arith.constant 0 : index
    %21 = vector.load %arg9[%c0_19, %c0_20] : memref<8x128xf32, #tpu.memory_space<vmem>>, vector<8x128xf32>
    tpu.vector_store %arg9[%c0_19, %c0_20], %14 {strides = array<i32>} : memref<8x128xf32, #tpu.memory_space<vmem>>, vector<8x128xf32>,
    return
  }
  func.func @transform_0(%arg0: i32) -> (i32, i32) {
    %c0_i32 = arith.constant 0 : i32
    %c0_i32_0 = arith.constant 0 : i32
    return %arg0, %c0_i32 : i32, i32
  }
  func.func @transform_1(%arg0: i32) -> (i32, i32) {
    %c0_i32 = arith.constant 0 : i32
    %c0_i32_0 = arith.constant 0 : i32
    %c0_i32_1 = arith.constant 0 : i32
    return %c0_i32, %c0_i32_0 : i32, i32
  }
  func.func @transform_2(%arg0: i32) -> (i32, i32) {
    %c0_i32 = arith.constant 0 : i32
    %c0_i32_0 = arith.constant 0 : i32
    %c0_i32_1 = arith.constant 0 : i32
    return %c0_i32, %c0_i32_0 : i32, i32
  }
  func.func @transform_3(%arg0: i32) -> (i32, i32) {
    %c0_i32 = arith.constant 0 : i32
    %c0_i32_0 = arith.constant 0 : i32
    %c0_i32_1 = arith.constant 0 : i32
    return %c0_i32, %c0_i32_0 : i32, i32
  }
  func.func @transform_4(%arg0: i32) -> (i32, i32) {
    %c0_i32 = arith.constant 0 : i32
    %c0_i32_0 = arith.constant 0 : i32
    %c0_i32_1 = arith.constant 0 : i32
    return %c0_i32, %c0_i32_0 : i32, i32
  }
  func.func @transform_5(%arg0: i32) -> (i32, i32) {
    %c0_i32 = arith.constant 0 : i32
    %c0_i32_0 = arith.constant 0 : i32
    %c0_i32_1 = arith.constant 0 : i32
    return %c0_i32, %c0_i32_0 : i32, i32
  }
  func.func @transform_6(%arg0: i32) -> (i32, i32) {
    %c0_i32 = arith.constant 0 : i32
    %c0_i32_0 = arith.constant 0 : i32
    %c0_i32_1 = arith.constant 0 : i32
    return %c0_i32, %c0_i32_0 : i32, i32
  }
  func.func @transform_7(%arg0: i32) -> (i32, i32) {
    %c0_i32 = arith.constant 0 : i32
    %c0_i32_0 = arith.constant 0 : i32
    return %arg0, %c0_i32 : i32, i32
  }
  func.func @transform_8(%arg0: i32) -> (i32, i32) {
    %c0_i32 = arith.constant 0 : i32
    %c0_i32_0 = arith.constant 0 : i32
    return %arg0, %c0_i32 : i32, i32
  }
}

</mosaic_0001>

<llo_original>
// kernel: tpu_custom_call.1
$region0: #{tpu_custom_call.1}
  #allocation0 [shape = 'u32[]', space=smem, size = 0x4, offset = 0x4, fixed_abs, tag = 'smem constant byte address 0x4 - core index']
  #allocation1 [shape = 'u32[72,128]{1,0:T(1,128)}', space=vmem, size = 0x9000, scoped, tag = 'internal scratch']
  %s0 = inlined_call_operand.hbm [shape: f32[8,128], index: 0, kind: input, shape index: {}]
  %s1 = inlined_call_operand.hbm [shape: f32[128,128], index: 1, kind: input, shape index: {}]
  %s2 = inlined_call_operand.vmem [shape: f32[1,128], index: 2, kind: input, shape index: {}]
  %s3 = inlined_call_operand.hbm [shape: f32[128,128], index: 3, kind: input, shape index: {}]
  %s4 = inlined_call_operand.vmem [shape: f32[1,128], index: 4, kind: input, shape index: {}]
  %s5 = inlined_call_operand.hbm [shape: f32[128,128], index: 5, kind: input, shape index: {}]
  %s6 = inlined_call_operand.vmem [shape: f32[1,128], index: 6, kind: input, shape index: {}]
  %s7 = inlined_call_operand.hbm [shape: f32[8,128], index: 7, kind: output, shape index: {0}]
  %s8 = inlined_call_operand.hbm [shape: f32[8,128], index: 8, kind: output, shape index: {1}]
  %9 = xla_tuple %s7, %s8
  %s10 = sld [smem:[#allocation0]]
  $region62: #{tpu_custom_call.1} parent=0
    _
  %s12 = ssub.s32 1, %s10
  %s13 = scalar_select 0, %s12, %s10
  $region1: #{tpu_custom_call.1} parent=0
    #allocation2 [shape = 'u8[4096]{0}', space=vmem, size = 0x1000, scoped, tag = 'input window, operand 0, single buffered']
    #allocation3 [shape = 's32[1]{0}', space=sflag, size = 0x4, scoped, tag = 'scoped memory for tpu_custom_call.1']
    #allocation4 [shape = 's32[1]{0}', space=sflag, size = 0x4, scoped, tag = 'scoped memory for tpu_custom_call.1']
    #allocation5 [shape = 'u8[65536]{0}', space=vmem, size = 0x10000, scoped, tag = 'input window, operand 1, single buffered']
    #allocation6 [shape = 's32[1]{0}', space=sflag, size = 0x4, scoped, tag = 'scoped memory for tpu_custom_call.1']
    #allocation7 [shape = 'u8[65536]{0}', space=vmem, size = 0x10000, scoped, tag = 'input window, operand 3, single buffered']
    #allocation8 [shape = 'u8[65536]{0}', space=vmem, size = 0x10000, scoped, tag = 'input window, operand 5, single buffered']
    #allocation9 [shape = 's32[1]{0}', space=sflag, size = 0x4, scoped, tag = 'scoped memory for tpu_custom_call.1']
    #allocation10 [shape = 'u8[4096]{0}', space=vmem, size = 0x1000, scoped, tag = 'output window, operand 0, single buffered']
    #allocation11 [shape = 'u8[4096]{0}', space=vmem, size = 0x1000, scoped, tag = 'output window, operand 1, single buffered']
    #allocation12 [shape = 's32[1]{0}', space=sflag, size = 0x4, scoped, tag = 'scoped memory for tpu_custom_call.1']
    %14 = vsyncpa [#allocation3], 0
    %15 = vsyncpa [#allocation6], 0
    %16 = vsyncpa [#allocation9], 0
    %17 = vsyncpa [#allocation4], 0
    %18 = vsyncpa [#allocation12], 0
    // Predicated region
    $region2: #{tpu_custom_call.1} parent=1 // pred_check
      _
    $region3: #{tpu_custom_call.1} parent=1 // pred_check_branch
      %20 = sbr.rel (0) target = $region5
    $region4: #{tpu_custom_call.1} parent=1 // pred_region
      %22 = vsyncadd [#allocation3], 0
      %s24 = sshll.u32 %s0, 4
      %s25 = int_to_ptr.hbm [resolvable:$true] %s24
      %s26 = sshll.u32 [#allocation2], 4
      %s27 = int_to_ptr.vmem [resolvable:$true] %s26
      %29 = dma.hbm_to_vmem [thread:$0]  %s25, 128, %s27, [#allocation3]
    $region5: #{tpu_custom_call.1} parent=1 // pred_fallthru
      _
    // Predicated region
    $region6: #{tpu_custom_call.1} parent=1 // pred_check
      _
    $region7: #{tpu_custom_call.1} parent=1 // pred_check_branch
      %31 = sbr.rel (0) target = $region9
    $region8: #{tpu_custom_call.1} parent=1 // pred_region
      %33 = vsyncadd [#allocation6], 0
      %s34 = sshll.u32 %s1, 4
      %s35 = int_to_ptr.hbm [resolvable:$true] %s34
      %s36 = sshll.u32 [#allocation5], 4
      %s37 = int_to_ptr.vmem [resolvable:$true] %s36
      %42 = dma.hbm_to_vmem [thread:$0]  %s35, 2048, %s37, [#allocation6], 128, 128, 8
    $region9: #{tpu_custom_call.1} parent=1 // pred_fallthru
      _
    // Predicated region
    $region10: #{tpu_custom_call.1} parent=1 // pred_check
      _
    $region11: #{tpu_custom_call.1} parent=1 // pred_check_branch
      %44 = sbr.rel (0) target = $region13
    $region12: #{tpu_custom_call.1} parent=1 // pred_region
      _
    $region13: #{tpu_custom_call.1} parent=1 // pred_fallthru
      _
    // Predicated region
    $region14: #{tpu_custom_call.1} parent=1 // pred_check
      _
    $region15: #{tpu_custom_call.1} parent=1 // pred_check_branch
      %46 = sbr.rel (0) target = $region17
    $region16: #{tpu_custom_call.1} parent=1 // pred_region
      %48 = vsyncadd [#allocation6], 0
      %s49 = sshll.u32 %s3, 4
      %s50 = int_to_ptr.hbm [resolvable:$true] %s49
      %s51 = sshll.u32 [#allocation7], 4
      %s52 = int_to_ptr.vmem [resolvable:$true] %s51
      %57 = dma.hbm_to_vmem [thread:$0]  %s50, 2048, %s52, [#allocation6], 128, 128, 8
    $region17: #{tpu_custom_call.1} parent=1 // pred_fallthru
      _
    // Predicated region
    $region18: #{tpu_custom_call.1} parent=1 // pred_check
      _
    $region19: #{tpu_custom_call.1} parent=1 // pred_check_branch
      %59 = sbr.rel (0) target = $region21
    $region20: #{tpu_custom_call.1} parent=1 // pred_region
      _
    $region21: #{tpu_custom_call.1} parent=1 // pred_fallthru
      _
    // Predicated region
    $region22: #{tpu_custom_call.1} parent=1 // pred_check
      _
    $region23: #{tpu_custom_call.1} parent=1 // pred_check_branch
      %61 = sbr.rel (0) target = $region25
    $region24: #{tpu_custom_call.1} parent=1 // pred_region
      %63 = vsyncadd [#allocation9], 0
      %s64 = sshll.u32 %s5, 4
      %s65 = int_to_ptr.hbm [resolvable:$true] %s64
      %s66 = sshll.u32 [#allocation8], 4
      %s67 = int_to_ptr.vmem [resolvable:$true] %s66
      %72 = dma.hbm_to_vmem [thread:$0]  %s65, 2048, %s67, [#allocation9], 128, 128, 8
    $region25: #{tpu_custom_call.1} parent=1 // pred_fallthru
      _
    // Predicated region
    $region26: #{tpu_custom_call.1} parent=1 // pred_check
      _
    $region27: #{tpu_custom_call.1} parent=1 // pred_check_branch
      %74 = sbr.rel (0) target = $region29
    $region28: #{tpu_custom_call.1} parent=1 // pred_region
      _
    $region29: #{tpu_custom_call.1} parent=1 // pred_fallthru
      _
    // Predicated region
    $region30: #{tpu_custom_call.1} parent=1 // pred_check
      _
    $region31: #{tpu_custom_call.1} parent=1 // pred_check_branch
      %76 = sbr.rel (0) target = $region33
    $region32: #{tpu_custom_call.1} parent=1 // pred_region
      %78 = dma.done [#allocation3], 128
    $region33: #{tpu_custom_call.1} parent=1 // pred_fallthru
      _
    // Predicated region
    $region34: #{tpu_custom_call.1} parent=1 // pred_check
      _
    $region35: #{tpu_custom_call.1} parent=1 // pred_check_branch
      %80 = sbr.rel (0) target = $region37
    $region36: #{tpu_custom_call.1} parent=1 // pred_region
      %82 = dma.done [#allocation6], 2048
    $region37: #{tpu_custom_call.1} parent=1 // pred_fallthru
      _
    // Predicated region
    $region38: #{tpu_custom_call.1} parent=1 // pred_check
      _
    $region39: #{tpu_custom_call.1} parent=1 // pred_check_branch
      %84 = sbr.rel (0) target = $region41
    $region40: #{tpu_custom_call.1} parent=1 // pred_region
      %86 = dma.done [#allocation6], 2048
    $region41: #{tpu_custom_call.1} parent=1 // pred_fallthru
      _
    // Predicated region
    $region42: #{tpu_custom_call.1} parent=1 // pred_check
      _
    $region43: #{tpu_custom_call.1} parent=1 // pred_check_branch
      %88 = sbr.rel (0) target = $region45
    $region44: #{tpu_custom_call.1} parent=1 // pred_region
      %90 = dma.done [#allocation9], 2048
    $region45: #{tpu_custom_call.1} parent=1 // pred_fallthru
      _
    %v91 = vld [vmem:[#allocation2] sm:$0xff]
    %v92 = vld [vmem:[#allocation5] sm:$0xff]
    %v93 = vld [vmem:[#allocation5 + $0x8] sm:$0xff]
    %v94 = vld [vmem:[#allocation5 + $0x10] sm:$0xff]
    %v95 = vld [vmem:[#allocation5 + $0x18] sm:$0xff]
    %v96 = vld [vmem:[#allocation5 + $0x20] sm:$0xff]
    %v97 = vld [vmem:[#allocation5 + $0x28] sm:$0xff]
    %v98 = vld [vmem:[#allocation5 + $0x30] sm:$0xff]
    %v99 = vld [vmem:[#allocation5 + $0x38] sm:$0xff]
    %v100 = vld [vmem:[#allocation5 + $0x40] sm:$0xff]
    %v101 = vld [vmem:[#allocation5 + $0x48] sm:$0xff]
    %v102 = vld [vmem:[#allocation5 + $0x50] sm:$0xff]
    %v103 = vld [vmem:[#allocation5 + $0x58] sm:$0xff]
    %v104 = vld [vmem:[#allocation5 + $0x60] sm:$0xff]
    %v105 = vld [vmem:[#allocation5 + $0x68] sm:$0xff]
    %v106 = vld [vmem:[#allocation5 + $0x70] sm:$0xff]
    %v107 = vld [vmem:[#allocation5 + $0x78] sm:$0xff]
    %v108 = vld [vmem:[%s2] sm:$0x1]
    %v110 = vperm.slane %v108, 0
    %112 = vmatpush.msra.mxu0 %v107
    %113 = vmatpush.msra.mxu0 %v106
    %114 = vmatpush.msra.mxu0 %v105
    %115 = vmatpush.msra.mxu0 %v104
    %116 = vmatpush.msra.mxu0 %v103
    %117 = vmatpush.msra.mxu0 %v102
    %118 = vmatpush.msra.mxu0 %v101
    %119 = vmatpush.msra.mxu0 %v100
    %120 = vmatpush.msra.mxu0 %v99
    %121 = vmatpush.msra.mxu0 %v98
    %122 = vmatpush.msra.mxu0 %v97
    %123 = vmatpush.msra.mxu0 %v96
    %124 = vmatpush.msra.mxu0 %v95
    %125 = vmatpush.msra.mxu0 %v94
    %126 = vmatpush.msra.mxu0 %v93
    %127 = vmatpush.msra.mxu0 %v92
    %128 = vmatmul.f32.gmra.mxu0 %v91
    %v129 = vpop.f32.mrf.mxu0
    %v130 = vadd.f32 %v110, %v129
    %131 = vdwg.mxu0
    %v132 = vmax.f32 %v130, 0.0
    %v133 = vld [vmem:[#allocation7] sm:$0xff]
    %v134 = vld [vmem:[#allocation7 + $0x8] sm:$0xff]
    %v135 = vld [vmem:[#allocation7 + $0x10] sm:$0xff]
    %v136 = vld [vmem:[#allocation7 + $0x18] sm:$0xff]
    %v137 = vld [vmem:[#allocation7 + $0x20] sm:$0xff]
    %v138 = vld [vmem:[#allocation7 + $0x28] sm:$0xff]
    %v139 = vld [vmem:[#allocation7 + $0x30] sm:$0xff]
    %v140 = vld [vmem:[#allocation7 + $0x38] sm:$0xff]
    %v141 = vld [vmem:[#allocation7 + $0x40] sm:$0xff]
    %v142 = vld [vmem:[#allocation7 + $0x48] sm:$0xff]
    %v143 = vld [vmem:[#allocation7 + $0x50] sm:$0xff]
    %v144 = vld [vmem:[#allocation7 + $0x58] sm:$0xff]
    %v145 = vld [vmem:[#allocation7 + $0x60] sm:$0xff]
    %v146 = vld [vmem:[#allocation7 + $0x68] sm:$0xff]
    %v147 = vld [vmem:[#allocation7 + $0x70] sm:$0xff]
    %v148 = vld [vmem:[#allocation7 + $0x78] sm:$0xff]
    %v149 = vld [vmem:[%s4] sm:$0x1]
    %v151 = vperm.slane %v149, 0
    %153 = vmatpush.msra.mxu0 %v148
    %154 = vmatpush.msra.mxu0 %v147
    %155 = vmatpush.msra.mxu0 %v146
    %156 = vmatpush.msra.mxu0 %v145
    %157 = vmatpush.msra.mxu0 %v144
    %158 = vmatpush.msra.mxu0 %v143
    %159 = vmatpush.msra.mxu0 %v142
    %160 = vmatpush.msra.mxu0 %v141
    %161 = vmatpush.msra.mxu0 %v140
    %162 = vmatpush.msra.mxu0 %v139
    %163 = vmatpush.msra.mxu0 %v138
    %164 = vmatpush.msra.mxu0 %v137
    %165 = vmatpush.msra.mxu0 %v136
    %166 = vmatpush.msra.mxu0 %v135
    %167 = vmatpush.msra.mxu0 %v134
    %168 = vmatpush.msra.mxu0 %v133
    %169 = vmatmul.f32.gmra.mxu0 %v132
    %v170 = vpop.f32.mrf.mxu0
    %v171 = vadd.f32 %v151, %v170
    %172 = vdwg.mxu0
    %v173 = vmax.f32 %v171, 0.0
    %v174 = vld [vmem:[#allocation8] sm:$0xff]
    %v175 = vld [vmem:[#allocation8 + $0x8] sm:$0xff]
    %v176 = vld [vmem:[#allocation8 + $0x10] sm:$0xff]
    %v177 = vld [vmem:[#allocation8 + $0x18] sm:$0xff]
    %v178 = vld [vmem:[#allocation8 + $0x20] sm:$0xff]
    %v179 = vld [vmem:[#allocation8 + $0x28] sm:$0xff]
    %v180 = vld [vmem:[#allocation8 + $0x30] sm:$0xff]
    %v181 = vld [vmem:[#allocation8 + $0x38] sm:$0xff]
    %v182 = vld [vmem:[#allocation8 + $0x40] sm:$0xff]
    %v183 = vld [vmem:[#allocation8 + $0x48] sm:$0xff]
    %v184 = vld [vmem:[#allocation8 + $0x50] sm:$0xff]
    %v185 = vld [vmem:[#allocation8 + $0x58] sm:$0xff]
    %v186 = vld [vmem:[#allocation8 + $0x60] sm:$0xff]
    %v187 = vld [vmem:[#allocation8 + $0x68] sm:$0xff]
    %v188 = vld [vmem:[#allocation8 + $0x70] sm:$0xff]
    %v189 = vld [vmem:[#allocation8 + $0x78] sm:$0xff]
    %v190 = vld [vmem:[%s6] sm:$0x1]
    %v192 = vperm.slane %v190, 0
    %194 = vmatpush.msra.mxu0 %v189
    %195 = vmatpush.msra.mxu0 %v188
    %196 = vmatpush.msra.mxu0 %v187
    %197 = vmatpush.msra.mxu0 %v186
    %198 = vmatpush.msra.mxu0 %v185
    %199 = vmatpush.msra.mxu0 %v184
    %200 = vmatpush.msra.mxu0 %v183
    %201 = vmatpush.msra.mxu0 %v182
    %202 = vmatpush.msra.mxu0 %v181
    %203 = vmatpush.msra.mxu0 %v180
    %204 = vmatpush.msra.mxu0 %v179
    %205 = vmatpush.msra.mxu0 %v178
    %206 = vmatpush.msra.mxu0 %v177
    %207 = vmatpush.msra.mxu0 %v176
    %208 = vmatpush.msra.mxu0 %v175
    %209 = vmatpush.msra.mxu0 %v174
    %210 = vmatmul.f32.gmra.mxu0 %v173
    %v211 = vpop.f32.mrf.mxu0
    %v212 = vadd.f32 %v192, %v211
    %213 = vdwg.mxu0
    %214 = vst [vmem:[#allocation10] sm:$0xff] %v212
    %215 = vst [vmem:[#allocation11] sm:$0xff] %v173
    // Predicated region
    $region46: #{tpu_custom_call.1} parent=1 // pred_check
      _
    $region47: #{tpu_custom_call.1} parent=1 // pred_check_branch
      %217 = sbr.rel (0) target = $region49
    $region48: #{tpu_custom_call.1} parent=1 // pred_region
      %219 = vsyncadd [#allocation4], 0
      %s221 = sshll.u32 [#allocation10], 4
      %s222 = int_to_ptr.vmem [resolvable:$true] %s221
      %s223 = sshll.u32 %s7, 4
      %s224 = int_to_ptr.hbm [resolvable:$true] %s223
      %226 = dma.vmem_to_hbm [thread:$0]  %s222, 128, %s224, [#allocation4]
    $region49: #{tpu_custom_call.1} parent=1 // pred_fallthru
      _
    // Predicated region
    $region50: #{tpu_custom_call.1} parent=1 // pred_check
      _
    $region51: #{tpu_custom_call.1} parent=1 // pred_check_branch
      %228 = sbr.rel (0) target = $region53
    $region52: #{tpu_custom_call.1} parent=1 // pred_region
      %230 = vsyncadd [#allocation12], 0
      %s232 = sshll.u32 [#allocation11], 4
      %s233 = int_to_ptr.vmem [resolvable:$true] %s232
      %s234 = sshll.u32 %s8, 4
      %s235 = int_to_ptr.hbm [resolvable:$true] %s234
      %237 = dma.vmem_to_hbm [thread:$0]  %s233, 128, %s235, [#allocation12]
    $region53: #{tpu_custom_call.1} parent=1 // pred_fallthru
      _
    // Predicated region
    $region54: #{tpu_custom_call.1} parent=1 // pred_check
      _
    $region55: #{tpu_custom_call.1} parent=1 // pred_check_branch
      %239 = sbr.rel (0) target = $region57
    $region56: #{tpu_custom_call.1} parent=1 // pred_region
      %241 = dma.done [#allocation4], 128
    $region57: #{tpu_custom_call.1} parent=1 // pred_fallthru
      _
    // Predicated region
    $region58: #{tpu_custom_call.1} parent=1 // pred_check
      _
    $region59: #{tpu_custom_call.1} parent=1 // pred_check_branch
      %243 = sbr.rel (0) target = $region61
    $region60: #{tpu_custom_call.1} parent=1 // pred_region
      %245 = dma.done [#allocation12], 128
    $region61: #{tpu_custom_call.1} parent=1 // pred_fallthru
      _
    %246 = vsyncpa [#allocation3], 1
    %247 = vsyncpa [#allocation6], 1
    %248 = vsyncpa [#allocation9], 1
    %249 = vsyncpa [#allocation4], 1
    %250 = vsyncpa [#allocation12], 1

</llo_original>
